<compile_context>
chip_gen: v7x
topology: tpu7x:2x2x1
jax: 0.10.0
libtpu: 0.0.40
codegen_flags: <defaults>
</compile_context>

<pallas_src>
import functools

import jax
import jax.numpy as jnp
from jax.experimental import pallas as pl
from jax.experimental.pallas import tpu as pltpu

_EPS = 1e-5                       # nn.BatchNorm2d default eps
_VMEM_LIMIT = 48 * 1024 * 1024    # < v7x 64 MiB physical VMEM, fine on v5e/v6e


def _round_up(x, m):
    return (x + m - 1) // m * m


def _vmem_spec():
    return pl.BlockSpec(memory_space=pltpu.MemorySpace.VMEM)


# ---------------------------------------------------------------------------
# Wrapper-side relayout: pad + stride-phase decomposition + row flatten.
# After this, conv/pool tap (i, j) is a constant row offset into `rows`.
# ---------------------------------------------------------------------------

def _phase_flatten(x, K, stride, pad):
    """Returns (rows (N, R, C), tap_offsets (K*K,) int32, (PH, PW, OH, OW))."""
    N, H, W, C = x.shape
    Hp, Wp = H + 2 * pad, W + 2 * pad
    OH = (Hp - K) // stride + 1
    OW = (Wp - K) // stride + 1
    PH = -(-Hp // stride)
    PW = -(-Wp // stride)
    if pad:
        x = jnp.pad(x, ((0, 0), (pad, pad), (pad, pad), (0, 0)))
    phases = []
    for p in range(stride):
        for q in range(stride):
            ph = x[:, p::stride, q::stride, :]
            ph = jnp.pad(ph, ((0, 0), (0, PH - ph.shape[1]),
                              (0, PW - ph.shape[2]), (0, 0)))
            phases.append(ph.reshape(N, PH * PW, C))
    rows = phases[0] if len(phases) == 1 else jnp.concatenate(phases, axis=1)
    amax = (K - 1) // stride
    shift_max = amax * PW + amax
    R = _round_up(stride * stride * PH * PW + shift_max, 8)
    rows = jnp.pad(rows, ((0, 0), (0, R - rows.shape[1]), (0, 0)))
    offs = jnp.array(
        [((i % stride) * stride + (j % stride)) * PH * PW
         + (i // stride) * PW + (j // stride)
         for i in range(K) for j in range(K)],
        dtype=jnp.int32)
    return rows, offs, (PH, PW, OH, OW)


# ---------------------------------------------------------------------------
# Conv kernel: K*K accumulated shifted matmuls (grid = batch x cout x taps)
# ---------------------------------------------------------------------------

def _conv_tap_kernel(relu, offs_ref, x_ref, w_ref, b_ref, o_ref, acc_ref):
    t = pl.program_id(2)

    @pl.when(t == 0)
    def _init():
        acc_ref[...] = jnp.zeros_like(acc_ref)

    off = offs_ref[t]
    m = acc_ref.shape[0]
    a = x_ref[0, pl.ds(off, m), :].astype(jnp.bfloat16)       # (M, Cin)
    acc_ref[...] += jnp.dot(a, w_ref[0], preferred_element_type=jnp.float32)

    @pl.when(t == pl.num_programs(2) - 1)
    def _finish():
        r = acc_ref[...] + b_ref[...]
        if relu:
            r = jnp.maximum(r, 0.0)
        o_ref[0] = r.astype(o_ref.dtype)


def conv2d(x, w_taps, bias, K, stride, pad, relu=False):
    """x: (N,H,W,Cin) f32; w_taps: (K*K, Cin, Cout) bf16; bias: (Cout,) or None."""
    N, H, W, Cin = x.shape
    KK, _, Cout = w_taps.shape
    rows, offs, (PH, PW, OH, OW) = _phase_flatten(x, K, stride, pad)
    M = PH * PW
    R = rows.shape[1]

    if bias is None:
        bias2 = jnp.zeros((1, Cout), jnp.float32)
    else:
        bias2 = bias.reshape(1, Cout).astype(jnp.float32)

    # Output-channel tiling (single full-width tile when Cout is not a
    # multiple of 128 -- e.g. 64 here; padding channels to 128 would double
    # activation HBM traffic, so we keep the natural width).
    tn = 128 if Cout % 128 == 0 else Cout
    n_ct = Cout // tn

    flops = 2 * N * M * KK * Cin * Cout
    bytes_acc = int(rows.size * 4 + w_taps.size * 2 + N * M * Cout * 4)

    dense = pl.pallas_call(
        functools.partial(_conv_tap_kernel, relu),
        out_shape=jax.ShapeDtypeStruct((N, M, Cout), jnp.float32),
        grid_spec=pltpu.PrefetchScalarGridSpec(
            num_scalar_prefetch=1,
            grid=(N, n_ct, KK),
            in_specs=[
                pl.BlockSpec((1, R, Cin), lambda b, n, t, offs: (b, 0, 0)),
                pl.BlockSpec((1, Cin, tn), lambda b, n, t, offs: (t, 0, n)),
                pl.BlockSpec((1, tn), lambda b, n, t, offs: (0, n)),
            ],
            out_specs=pl.BlockSpec((1, M, tn), lambda b, n, t, offs: (b, 0, n)),
            scratch_shapes=[pltpu.VMEM((M, tn), jnp.float32)],
        ),
        compiler_params=pltpu.CompilerParams(
            dimension_semantics=("parallel", "parallel", "arbitrary"),
            vmem_limit_bytes=_VMEM_LIMIT,
        ),
        cost_estimate=pl.CostEstimate(
            flops=flops, transcendentals=0, bytes_accessed=bytes_acc),
    )(offs, rows, w_taps, bias2)

    return dense.reshape(N, PH, PW, Cout)[:, :OH, :OW, :]


# ---------------------------------------------------------------------------
# BatchNorm batch statistics: one-pass sum / sum-of-squares, row-tiled grid
# ---------------------------------------------------------------------------

def _bn_stats_kernel(x_ref, o_ref):
    @pl.when(pl.program_id(0) == 0)
    def _init():
        o_ref[...] = jnp.zeros_like(o_ref)

    x = x_ref[...]
    o_ref[0:1, :] += jnp.sum(x, axis=0, keepdims=True)
    o_ref[1:2, :] += jnp.sum(x * x, axis=0, keepdims=True)


def bn_stats(x, eps=_EPS):
    """Per-channel (mean, rstd) over all leading dims (training-mode BN)."""
    C = x.shape[-1]
    x2 = x.reshape(-1, C)
    M = x2.shape[0]
    tm = min(512, _round_up(M, 8))
    Mp = _round_up(M, tm)
    if Mp != M:
        x2 = jnp.pad(x2, ((0, Mp - M), (0, 0)))   # zero rows: sums unchanged
    sums = pl.pallas_call(
        _bn_stats_kernel,
        out_shape=jax.ShapeDtypeStruct((8, C), jnp.float32),
        grid=(Mp // tm,),
        in_specs=[pl.BlockSpec((tm, C), lambda i: (i, 0))],
        out_specs=pl.BlockSpec((8, C), lambda i: (0, 0)),
        compiler_params=pltpu.CompilerParams(
            dimension_semantics=("arbitrary",),
            vmem_limit_bytes=_VMEM_LIMIT,
        ),
    )(x2)
    mean = sums[0:1, :] / M
    var = jnp.maximum(sums[1:2, :] / M - mean * mean, 0.0)
    rstd = jax.lax.rsqrt(var + eps)
    return mean, rstd


# ---------------------------------------------------------------------------
# Stem tail: BN-affine + ReLU + MaxPool(3,2) fused (tap grid, running max)
# ---------------------------------------------------------------------------

def _bn_relu_pool_kernel(offs_ref, x_ref, sc_ref, sh_ref, o_ref, acc_ref):
    t = pl.program_id(1)

    @pl.when(t == 0)
    def _init():
        acc_ref[...] = jnp.zeros_like(acc_ref)     # post-ReLU values are >= 0

    off = offs_ref[t]
    m = acc_ref.shape[0]
    v = x_ref[0, pl.ds(off, m), :]
    v = jnp.maximum(v * sc_ref[...] + sh_ref[...], 0.0)   # BN affine + ReLU
    acc_ref[...] = jnp.maximum(acc_ref[...], v)

    @pl.when(t == pl.num_programs(1) - 1)
    def _finish():
        o_ref[0] = acc_ref[...]


def bn_relu_maxpool(x, scale, shift, K=3, stride=2):
    N, H, W, C = x.shape
    rows, offs, (PH, PW, OH, OW) = _phase_flatten(x, K, stride, 0)
    M = PH * PW
    R = rows.shape[1]
    dense = pl.pallas_call(
        _bn_relu_pool_kernel,
        out_shape=jax.ShapeDtypeStruct((N, M, C), jnp.float32),
        grid_spec=pltpu.PrefetchScalarGridSpec(
            num_scalar_prefetch=1,
            grid=(N, K * K),
            in_specs=[
                pl.BlockSpec((1, R, C), lambda b, t, offs: (b, 0, 0)),
                pl.BlockSpec((1, C), lambda b, t, offs: (0, 0)),
                pl.BlockSpec((1, C), lambda b, t, offs: (0, 0)),
            ],
            out_specs=pl.BlockSpec((1, M, C), lambda b, t, offs: (b, 0, 0)),
            scratch_shapes=[pltpu.VMEM((M, C), jnp.float32)],
        ),
        compiler_params=pltpu.CompilerParams(
            dimension_semantics=("parallel", "arbitrary"),
            vmem_limit_bytes=_VMEM_LIMIT,
        ),
    )(offs, rows, scale, shift)
    return dense.reshape(N, PH, PW, C)[:, :OH, :OW, :]


# ---------------------------------------------------------------------------
# ResBlock tail: BN-affine -> FiLM (in-kernel broadcast) -> ReLU -> +residual
# (optionally fused with the final AdaptiveAvgPool2d spatial mean)
# ---------------------------------------------------------------------------

def _film_tail_kernel(z_ref, y_ref, sc_ref, sh_ref, g_ref, b_ref, o_ref):
    zn = z_ref[0] * sc_ref[...] + sh_ref[...]              # BN (batch stats)
    f = jnp.maximum(zn * g_ref[0] + b_ref[0], 0.0)         # FiLM + ReLU
    o_ref[0] = f + y_ref[0]                                # residual add


def _film_tail_pool_kernel(z_ref, y_ref, sc_ref, sh_ref, g_ref, b_ref, o_ref):
    zn = z_ref[0] * sc_ref[...] + sh_ref[...]              # BN (batch stats)
    f = jnp.maximum(zn * g_ref[0] + b_ref[0], 0.0) + y_ref[0]
    o_ref[0] = jnp.mean(f, axis=0, keepdims=True)          # fused avg-pool


def _film_tail_call(kernel, out_rows, z, ya, scale, shift, gamma, beta):
    N, H, W, C = z.shape
    HW = H * W
    gamma3 = gamma.reshape(N, 1, C).astype(jnp.float32)
    beta3 = beta.reshape(N, 1, C).astype(jnp.float32)
    return pl.pallas_call(
        kernel,
        out_shape=jax.ShapeDtypeStruct((N, out_rows, C), jnp.float32),
        grid=(N,),
        in_specs=[
            pl.BlockSpec((1, HW, C), lambda b: (b, 0, 0)),
            pl.BlockSpec((1, HW, C), lambda b: (b, 0, 0)),
            pl.BlockSpec((1, C), lambda b: (0, 0)),
            pl.BlockSpec((1, C), lambda b: (0, 0)),
            pl.BlockSpec((1, 1, C), lambda b: (b, 0, 0)),
            pl.BlockSpec((1, 1, C), lambda b: (b, 0, 0)),
        ],
        out_specs=pl.BlockSpec((1, out_rows, C), lambda b: (b, 0, 0)),
        compiler_params=pltpu.CompilerParams(
            dimension_semantics=("parallel",),
            vmem_limit_bytes=_VMEM_LIMIT,
        ),
    )(z.reshape(N, HW, C), ya.reshape(N, HW, C), scale, shift, gamma3, beta3)


def film_tail(z, ya, scale, shift, gamma, beta):
    N, H, W, C = z.shape
    out = _film_tail_call(_film_tail_kernel, H * W, z, ya, scale, shift,
                          gamma, beta)
    return out.reshape(N, H, W, C)


def film_tail_pool(z, ya, scale, shift, gamma, beta):
    """Last block: fuse the (1,1) adaptive avg-pool; returns (N, C) pooled."""
    N, H, W, C = z.shape
    out = _film_tail_call(_film_tail_pool_kernel, 1, z, ya, scale, shift,
                          gamma, beta)
    return out.reshape(N, C)


# ---------------------------------------------------------------------------
# Linear on the pooled feature vector (output padded to 128 lanes)
# ---------------------------------------------------------------------------

def _fc_kernel(p_ref, w_ref, b_ref, o_ref):
    o_ref[...] = jnp.dot(p_ref[...].astype(jnp.bfloat16), w_ref[...],
                         preferred_element_type=jnp.float32) + b_ref[...]


def fc(pooled, w_pad, b_pad, num_classes):
    N, _ = pooled.shape
    Fp = w_pad.shape[1]
    out = pl.pallas_call(
        _fc_kernel,
        out_shape=jax.ShapeDtypeStruct((N, Fp), jnp.float32),
        in_specs=[_vmem_spec()] * 3,
        out_specs=_vmem_spec(),
        compiler_params=pltpu.CompilerParams(vmem_limit_bytes=_VMEM_LIMIT),
    )(pooled, w_pad, b_pad)
    return out[:, :num_classes]


# ---------------------------------------------------------------------------
# Parameters & forward
# ---------------------------------------------------------------------------

def init_params(key, layer_cfg, out_channels, num_classes=100):
    keys = iter(jax.random.split(key, 64))

    def nrm(shape, scale=0.05, dtype=jnp.float32):
        return (scale * jax.random.normal(next(keys), shape,
                                          jnp.float32)).astype(dtype)

    Fp = _round_up(num_classes, 128)
    fc_w = nrm((out_channels, num_classes))
    fc_b = nrm((num_classes,))

    params = {
        # conv weights stored as (K*K, Cin, Cout) bf16 (MXU operand dtype);
        # stem conv bias omitted: cancelled exactly by the following BN.
        "pre_w": nrm((7 * 7, 3, 64), dtype=jnp.bfloat16),
        "pre_bn_g": 1.0 + nrm((64,)),
        "pre_bn_b": nrm((64,)),
        "blocks": [],
        "fc_w": jnp.pad(fc_w, ((0, 0), (0, Fp - num_classes))).astype(jnp.bfloat16),
        "fc_b": jnp.pad(fc_b, (0, Fp - num_classes)).reshape(1, Fp),
    }
    for (n_block, in_c, out_c, k, s, p, emb_c) in layer_cfg:
        assert emb_c == out_c
        for _ in range(n_block):
            params["blocks"].append({
                "k": k, "s": s, "p": p,
                "w1": nrm((k * k, in_c, out_c), dtype=jnp.bfloat16),
                "b1": nrm((out_c,)),
                # conv2 bias omitted: cancelled exactly by the BatchNorm mean.
                "w2": nrm((k * k, out_c, out_c), dtype=jnp.bfloat16),
                "bn_g": 1.0 + nrm((out_c,)),
                "bn_b": nrm((out_c,)),
            })
    return params


def network_forward(params, x_nchw, embs):
    # TODO(synk): reference Network.forward calls layer(y) without the FiLM emb
    # that ResnetBlock.forward requires (would TypeError); we pass per-block
    # (beta, gamma) explicitly to keep the FiLM semantics runnable.  The
    # reference's nn.MaxPool(3, 2) (nonexistent) is treated as MaxPool2d(3, 2).
    x = jnp.transpose(x_nchw, (0, 2, 3, 1)).astype(jnp.float32)   # NCHW -> NHWC

    # ---- stem: Conv(3,64,7,2,3) -> BN -> ReLU -> MaxPool(3,2) ----
    y = conv2d(x, params["pre_w"], None, 7, 2, 3, relu=False)
    mean, rstd = bn_stats(y)
    scale = params["pre_bn_g"].reshape(1, -1) * rstd
    shift = params["pre_bn_b"].reshape(1, -1) - mean * scale
    y = bn_relu_maxpool(y, scale, shift, K=3, stride=2)

    # ---- FiLM-conditioned ResNet blocks ----
    n_blk = len(params["blocks"])
    pooled = None
    for idx, (blk, (beta, gamma)) in enumerate(zip(params["blocks"], embs)):
        ya = conv2d(y, blk["w1"], blk["b1"], blk["k"], blk["s"], blk["p"],
                    relu=True)
        z = conv2d(ya, blk["w2"], None, blk["k"], blk["s"], blk["p"],
                   relu=False)
        assert z.shape == ya.shape, "residual requires shape-preserving convs"
        mean, rstd = bn_stats(z)
        scale = blk["bn_g"].reshape(1, -1) * rstd
        shift = blk["bn_b"].reshape(1, -1) - mean * scale
        if idx == n_blk - 1:
            # Fuse AdaptiveAvgPool2d((1,1)) into the last block tail: the
            # final full-size feature map never touches HBM.
            pooled = film_tail_pool(z, ya, scale, shift, gamma, beta)
        else:
            y = film_tail(z, ya, scale, shift, gamma, beta)

    if pooled is None:           # no blocks: pool the stem output directly
        N, H, W, C = y.shape
        pooled = y.reshape(N, H * W, C).mean(axis=1)

    # ---- flatten -> Linear(out_channels, 100) ----
    return fc(pooled, params["fc_w"], params["fc_b"], num_classes=100)


if __name__ == "__main__":
    key = jax.random.PRNGKey(0)
    k_in, k_p, k_e = jax.random.split(key, 3)

    # layer_cfg: (n_block, in_chan, out_chan, kernel, stride, padding, emb_chan)
    layer_cfg = [(2, 64, 64, 3, 1, 1, 64)]
    out_channels = 64
    batch = 2

    params = init_params(k_p, layer_cfg, out_channels)
    x = jax.random.normal(k_in, (batch, 3, 16, 16), dtype=jnp.float32)

    n_blocks = sum(cfg[0] for cfg in layer_cfg)
    ekeys = jax.random.split(k_e, 2 * n_blocks)
    # per-block FiLM embedding: (beta, gamma), each [batch, out_chan]
    embs = [
        (
            0.1 * jax.random.normal(ekeys[2 * i], (batch, out_channels),
                                    jnp.float32),
            1.0 + 0.1 * jax.random.normal(ekeys[2 * i + 1],
                                          (batch, out_channels), jnp.float32),
        )
        for i in range(n_blocks)
    ]

    out = network_forward(params, x, embs)
    jax.block_until_ready(out)
    assert out.shape == (batch, 100) and out.dtype == jnp.float32
    print("KERNEL_OK")
</pallas_src>

<mosaic_0001>
module attributes {stable_mosaic.version = 11 : i64} {
  func.func @_conv_tap_kernel(%arg0: i32, %arg1: i32, %arg2: i32, %arg3: memref<49xi32, #tpu.memory_space<smem>>, %arg4: memref<1x520x3xf32, #tpu.memory_space<vmem>>, %arg5: memref<1x3x64xbf16, #tpu.memory_space<vmem>>, %arg6: memref<1x64xf32, #tpu.memory_space<vmem>>, %arg7: memref<1x121x64xf32, #tpu.memory_space<vmem>>, %arg8: memref<121x64xf32, #tpu.memory_space<vmem>>) attributes {dimension_semantics = [#tpu.dimension_semantics<parallel>, #tpu.dimension_semantics<parallel>, #tpu.dimension_semantics<arbitrary>], iteration_bounds = array<i64: 2, 1, 49>, scalar_prefetch = 1 : i64, scratch_operands = 1 : i64, tpu.core_type = #tpu.core_type<tc>, window_params = [{transform_indices = @transform_0, window_bounds = array<i64: 1, 520, 3>}, {transform_indices = @transform_1, window_bounds = array<i64: 1, 3, 64>}, {transform_indices = @transform_2, window_bounds = array<i64: 1, 64>}, {transform_indices = @transform_3, window_bounds = array<i64: 1, 121, 64>}]} {
    %c0_i32 = arith.constant 0 : i32
    %0 = arith.cmpi eq, %arg2, %c0_i32 : i32
    %1 = arith.extui %0 : i1 to i32
    %c0_i32_0 = arith.constant 0 : i32
    %2 = arith.cmpi ne, %1, %c0_i32_0 : i32
    scf.if %2 {
      %cst_10 = arith.constant 0.000000e+00 : f32
      %18 = vector.broadcast %cst_10 : f32 to vector<121x64xf32>
      %c0_11 = arith.constant 0 : index
      %c0_12 = arith.constant 0 : index
      %19 = vector.load %arg8[%c0_11, %c0_12] : memref<121x64xf32, #tpu.memory_space<vmem>>, vector<121x64xf32>
      tpu.vector_store %arg8[%c0_11, %c0_12], %18 {strides = array<i32>} : memref<121x64xf32, #tpu.memory_space<vmem>>, vector<121x64xf32>,
    } else {
    }
    %3 = arith.index_cast %arg2 : i32 to index
    %4 = memref.load %arg3[%3] : memref<49xi32, #tpu.memory_space<smem>>
    %c0 = arith.constant 0 : index
    %5 = arith.index_cast %4 : i32 to index
    %c0_1 = arith.constant 0 : index
    %6 = vector.load %arg4[%c0, %5, %c0_1] : memref<1x520x3xf32, #tpu.memory_space<vmem>>, vector<1x121x3xf32>
    %7 = vector.shape_cast %6 : vector<1x121x3xf32> to vector<121x3xf32>
    %8 = arith.truncf %7 : vector<121x3xf32> to vector<121x3xbf16>
    %c0_2 = arith.constant 0 : index
    %c0_3 = arith.constant 0 : index
    %9 = vector.load %arg8[%c0_2, %c0_3] : memref<121x64xf32, #tpu.memory_space<vmem>>, vector<121x64xf32>
    %c0_4 = arith.constant 0 : index
    %c0_5 = arith.constant 0 : index
    %c0_6 = arith.constant 0 : index
    %10 = vector.load %arg5[%c0_4, %c0_5, %c0_6] : memref<1x3x64xbf16, #tpu.memory_space<vmem>>, vector<1x3x64xbf16>
    %11 = vector.shape_cast %10 : vector<1x3x64xbf16> to vector<3x64xbf16>
    %cst = arith.constant dense<0.000000e+00> : vector<121x64xf32>
    %12 = tpu.matmul %8, %11, %cst {dimension_numbers = #tpu.dot_dimension_numbers<[1], [0], [0], [1], [0, 0, 1, 1], [], []>} : vector<121x3xbf16>, vector<3x64xbf16>, vector<121x64xf32> -> vector<121x64xf32>
    %13 = arith.addf %9, %12 : vector<121x64xf32>
    %c0_7 = arith.constant 0 : index
    %c0_8 = arith.constant 0 : index
    %14 = vector.load %arg8[%c0_7, %c0_8] : memref<121x64xf32, #tpu.memory_space<vmem>>, vector<121x64xf32>
    tpu.vector_store %arg8[%c0_7, %c0_8], %13 {strides = array<i32>} : memref<121x64xf32, #tpu.memory_space<vmem>>, vector<121x64xf32>,
    %c48_i32 = arith.constant 48 : i32
    %15 = arith.cmpi eq, %arg2, %c48_i32 : i32
    %16 = arith.extui %15 : i1 to i32
    %c0_i32_9 = arith.constant 0 : i32
    %17 = arith.cmpi ne, %16, %c0_i32_9 : i32
    scf.if %17 {
      %c0_10 = arith.constant 0 : index
      %c0_11 = arith.constant 0 : index
      %18 = vector.load %arg8[%c0_10, %c0_11] : memref<121x64xf32, #tpu.memory_space<vmem>>, vector<121x64xf32>
      %c0_12 = arith.constant 0 : index
      %c0_13 = arith.constant 0 : index
      %19 = vector.load %arg6[%c0_12, %c0_13] : memref<1x64xf32, #tpu.memory_space<vmem>>, vector<1x64xf32>
      %20 = vector.broadcast %19 : vector<1x64xf32> to vector<121x64xf32>
      %21 = arith.addf %18, %20 : vector<121x64xf32>
      %c0_14 = arith.constant 0 : index
      %c0_15 = arith.constant 0 : index
      %c0_16 = arith.constant 0 : index
      %22 = vector.load %arg7[%c0_14, %c0_15, %c0_16] : memref<1x121x64xf32, #tpu.memory_space<vmem>>, vector<1x121x64xf32>
      %23 = vector.shape_cast %22 : vector<1x121x64xf32> to vector<121x64xf32>
      %24 = vector.shape_cast %21 : vector<121x64xf32> to vector<1x121x64xf32>
      tpu.vector_store %arg7[%c0_14, %c0_15, %c0_16], %24 {strides = array<i32>} : memref<1x121x64xf32, #tpu.memory_space<vmem>>, vector<1x121x64xf32>,
    } else {
    }
    return
  }
  func.func @transform_0(%arg0: i32, %arg1: i32, %arg2: i32, %arg3: memref<49xi32, #tpu.memory_space<smem>>) -> (i32, i32, i32) {
    %c0_i32 = arith.constant 0 : i32
    %c0_i32_0 = arith.constant 0 : i32
    %c0_i32_1 = arith.constant 0 : i32
    return %arg0, %c0_i32, %c0_i32_0 : i32, i32, i32
  }
  func.func @transform_1(%arg0: i32, %arg1: i32, %arg2: i32, %arg3: memref<49xi32, #tpu.memory_space<smem>>) -> (i32, i32, i32) {
    %c0_i32 = arith.constant 0 : i32
    %c0_i32_0 = arith.constant 0 : i32
    return %arg2, %c0_i32, %arg1 : i32, i32, i32
  }
  func.func @transform_2(%arg0: i32, %arg1: i32, %arg2: i32, %arg3: memref<49xi32, #tpu.memory_space<smem>>) -> (i32, i32) {
    %c0_i32 = arith.constant 0 : i32
    %c0_i32_0 = arith.constant 0 : i32
    return %c0_i32, %arg1 : i32, i32
  }
  func.func @transform_3(%arg0: i32, %arg1: i32, %arg2: i32, %arg3: memref<49xi32, #tpu.memory_space<smem>>) -> (i32, i32, i32) {
    %c0_i32 = arith.constant 0 : i32
    %c0_i32_0 = arith.constant 0 : i32
    return %arg0, %c0_i32, %arg1 : i32, i32, i32
  }
}

</mosaic_0001>

<llo_original>
// kernel: tpu_custom_call.1
$region0: #{tpu_custom_call.1}
  #allocation0 [shape = 'u32[]', space=smem, size = 0x4, offset = 0x4, fixed_abs, tag = 'smem constant byte address 0x4 - core index']
  #allocation1 [shape = 'u32[144,128]{1,0:T(1,128)}', space=vmem, size = 0x12000, scoped, tag = 'internal scratch']
  #allocation2 [shape = 'f32[121,64]{1,0:T(8,128)}', space=vmem, size = 0x10000, scoped, tag = 'scratch operand']
  #allocation3 [shape = 's32[1]{0}', space=sflag, size = 0x4, scoped, tag = 'scoped memory for tpu_custom_call.1']
  #allocation4 [shape = 'u8[512]{0}', space=smem, size = 0x200, scoped, tag = 'prefetched SMEM operand 0']
  %s0 = inlined_call_operand.vmem [shape: s32[49], index: 0, kind: input, shape index: {}]
  %s1 = inlined_call_operand.vmem [shape: f32[2,520,3], index: 1, kind: input, shape index: {}]
  %s2 = inlined_call_operand.vmem [shape: bf16[49,3,64], index: 2, kind: input, shape index: {}]
  %s3 = inlined_call_operand.vmem [shape: f32[1,64], index: 3, kind: input, shape index: {}]
  %s4 = inlined_call_operand.vmem [shape: f32[2,121,64], index: 4, kind: output, shape index: {}]
  %s5 = sld [smem:[#allocation0]]
  $region53: #{tpu_custom_call.1} parent=0
    _
  %s7 = ssub.s32 1, %s5
  %s8 = scalar_select 0, %s7, %s5
  %s9 = sshll.u32 %s0, 4
  %s10 = int_to_ptr.vmem [resolvable:$true] %s9
  %12 = dma.vmem_to_smem %s10, 16, [#allocation4], [#allocation3]
  %13 = dma.done [#allocation3], 16
  %14 = sfence
  loop: start=0, step=1, limit=100
  $region2: #{tpu_custom_call.1} parent=0 // loop_pre_header
    _
  $region3: #{tpu_custom_call.1} parent=0 // loop_header
    %s16 = sphi 0, %s20
    %p17 = scmp.ge.s32.totalorder %s16, 100
    %s23 = sphi 0, %s42
    %s24 = sphi 0, %s38
    %s25 = sphi 0, %s34
    %s26 = sphi 0, %s23
    %s27 = sphi 0, %s24
    %s28 = sphi 0, %s25
    %s29 = sphi 0, %s26
    %s30 = sphi 0, %s27
    %s31 = sphi 0, %s28
    %s45 = sphi 0, %s47
    %s48 = sphi 0, %s45
    %s49 = sphi 0, %s48
    %s65 = sphi 0, %s49
    %s73 = sphi 0, %s75
    %s76 = sphi 0, %s73
    %s77 = sphi 0, %s76
    %s93 = sphi 0, %s77
    %s99 = sphi 0, %s101
    %s102 = sphi 0, %s99
    %s103 = sphi 0, %s102
    %s119 = sphi 0, %s103
    %s127 = sphi 0, %s129
    %s130 = sphi 0, %s127
    %s131 = sphi 0, %s130
    %s147 = sphi 0, %s131
  $region4: #{tpu_custom_call.1} parent=0 // loop_header_branch
    %19 = sbr.rel (%p17) target = $region8
  $region5: #{tpu_custom_call.1} parent=0 // loop_body
    %s21 = ssub.s32 %s16, 1
    %s22 = ssub.s32 %s16, 2
    %s32 = sadd.s32 1, %s25
    %p33 = scmp.ge.s32.totalorder %s32, 49
    %s34 = scalar_select %p33, 0, %s32
    %s35 = sadd.s32 1, %s24
    %s36 = scalar_select %p33, %s35, %s24
    %p37 = scmp.ge.s32.totalorder %s36, 1
    %s38 = scalar_select %p37, 0, %s36
    %s39 = sadd.s32 1, %s23
    %s40 = scalar_select %p37, %s39, %s23
    %p41 = scmp.ge.s32.totalorder %s40, 2
    %s42 = scalar_select %p41, 0, %s40
    %s43 = ssub.s32 %s23, %s42
    %p44 = scmp.eq.s32.totalorder %s43, 0
    %s46 = sadd.s32 %s45, 1
    %s47 = scalar_select %p44, %s45, %s46
    %p50 = pneg %p44
    %p51 = scmp.eq.s32.totalorder %s16, 97
    %p52 = por %p50, %p51
    %p53 = scmp.ne.s32.totalorder %s45, %s48
    %p54 = scmp.eq.s32.totalorder %s16, 0
    %p55 = por %p53, %p54
    %p56 = scmp.ne.s32.totalorder %s45, %s48
    %p57 = scmp.eq.s32.totalorder %s21, 97
    %p58 = por %p56, %p57
    %p59 = scmp.ne.s32.totalorder %s48, %s49
    %p60 = scmp.eq.s32.totalorder %s21, 0
    %p61 = por %p59, %p60
    %p62 = scmp.ne.s32.totalorder %s48, %s49
    %p63 = scmp.eq.s32.totalorder %s22, 97
    %p64 = por %p62, %p63
    %p66 = scmp.ne.s32.totalorder %s49, %s65
    %p67 = scmp.eq.s32.totalorder %s22, 0
    %p68 = por %p66, %p67
    %s69 = ssub.s32 %s25, %s34
    %s70 = ssub.s32 %s24, %s38
    %s71 = sor.u32 %s69, %s70
    %p72 = scmp.eq.s32.totalorder %s71, 0
    %s74 = sadd.s32 %s73, 1
    %s75 = scalar_select %p72, %s73, %s74
    %p78 = pneg %p72
    %p79 = scmp.eq.s32.totalorder %s16, 97
    %p80 = por %p78, %p79
    %p81 = scmp.ne.s32.totalorder %s73, %s76
    %p82 = scmp.eq.s32.totalorder %s16, 0
    %p83 = por %p81, %p82
    %p84 = scmp.ne.s32.totalorder %s73, %s76
    %p85 = scmp.eq.s32.totalorder %s21, 97
    %p86 = por %p84, %p85
    %p87 = scmp.ne.s32.totalorder %s76, %s77
    %p88 = scmp.eq.s32.totalorder %s21, 0
    %p89 = por %p87, %p88
    %p90 = scmp.ne.s32.totalorder %s76, %s77
    %p91 = scmp.eq.s32.totalorder %s22, 97
    %p92 = por %p90, %p91
    %p94 = scmp.ne.s32.totalorder %s77, %s93
    %p95 = scmp.eq.s32.totalorder %s22, 0
    %p96 = por %p94, %p95
    %s97 = ssub.s32 %s24, %s38
    %p98 = scmp.eq.s32.totalorder %s97, 0
    %s100 = sadd.s32 %s99, 1
    %s101 = scalar_select %p98, %s99, %s100
    %p104 = pneg %p98
    %p105 = scmp.eq.s32.totalorder %s16, 97
    %p106 = por %p104, %p105
    %p107 = scmp.ne.s32.totalorder %s99, %s102
    %p108 = scmp.eq.s32.totalorder %s16, 0
    %p109 = por %p107, %p108
    %p110 = scmp.ne.s32.totalorder %s99, %s102
    %p111 = scmp.eq.s32.totalorder %s21, 97
    %p112 = por %p110, %p111
    %p113 = scmp.ne.s32.totalorder %s102, %s103
    %p114 = scmp.eq.s32.totalorder %s21, 0
    %p115 = por %p113, %p114
    %p116 = scmp.ne.s32.totalorder %s102, %s103
    %p117 = scmp.eq.s32.totalorder %s22, 97
    %p118 = por %p116, %p117
    %p120 = scmp.ne.s32.totalorder %s103, %s119
    %p121 = scmp.eq.s32.totalorder %s22, 0
    %p122 = por %p120, %p121
    %s123 = ssub.s32 %s23, %s42
    %s124 = ssub.s32 %s24, %s38
    %s125 = sor.u32 %s123, %s124
    %p126 = scmp.eq.s32.totalorder %s125, 0
    %s128 = sadd.s32 %s127, 1
    %s129 = scalar_select %p126, %s127, %s128
    %p132 = pneg %p126
    %p133 = scmp.eq.s32.totalorder %s16, 97
    %p134 = por %p132, %p133
    %p135 = scmp.ne.s32.totalorder %s127, %s130
    %p136 = scmp.eq.s32.totalorder %s16, 0
    %p137 = por %p135, %p136
    %p138 = scmp.ne.s32.totalorder %s127, %s130
    %p139 = scmp.eq.s32.totalorder %s21, 97
    %p140 = por %p138, %p139
    %p141 = scmp.ne.s32.totalorder %s130, %s131
    %p142 = scmp.eq.s32.totalorder %s21, 0
    %p143 = por %p141, %p142
    %p144 = scmp.ne.s32.totalorder %s130, %s131
    %p145 = scmp.eq.s32.totalorder %s22, 97
    %p146 = por %p144, %p145
    %p148 = scmp.ne.s32.totalorder %s131, %s147
    %p149 = scmp.eq.s32.totalorder %s22, 0
    %p150 = por %p148, %p149
    %p151 = scmp.le.s32.totalorder 1, %s16
    %p152 = scmp.lt.s32.totalorder %s16, 99
    %p153 = pnand %p151, %p152
    %p154 = pneg %p153
    // Predicated region
    $region9: #{tpu_custom_call.1} parent=5 // pred_check
      _
    $region10: #{tpu_custom_call.1} parent=5 // pred_check_branch
      %156 = sbr.rel (%p153) target = $region12
    $region11: #{tpu_custom_call.1} parent=5 // pred_region
      %s157 = ssub.s32 %s16, 1
      // Predicated region
      $region13: #{tpu_custom_call.1} parent=11 // pred_check
        %p158 = pneg %p115
      $region14: #{tpu_custom_call.1} parent=11 // pred_check_branch
        %160 = sbr.rel (%p158) target = $region16
      $region15: #{tpu_custom_call.1} parent=11 // pred_region
        %p161 = scmp.lt.s32.totalorder %s27, 0
        %s162 = scalar_select %p161, %s27, 0
        %s163 = scalar_lea.vmem %s3, %s162
      $region16: #{tpu_custom_call.1} parent=11 // pred_fallthru
        _
    $region12: #{tpu_custom_call.1} parent=5 // pred_fallthru
      _
    %p164 = scmp.lt.s32.totalorder %s16, 98
    // Predicated region
    $region17: #{tpu_custom_call.1} parent=5 // pred_check
      %p165 = pneg %p164
    $region18: #{tpu_custom_call.1} parent=5 // pred_check_branch
      %167 = sbr.rel (%p165) target = $region20
    $region19: #{tpu_custom_call.1} parent=5 // pred_region
      // Predicated region
      $region21: #{tpu_custom_call.1} parent=19 // pred_check
        %p168 = pneg %p55
      $region22: #{tpu_custom_call.1} parent=19 // pred_check_branch
        %170 = sbr.rel (%p168) target = $region24
      $region23: #{tpu_custom_call.1} parent=19 // pred_region
        %p171 = scmp.lt.s32.totalorder %s23, 1
        %s172 = scalar_select %p171, %s23, 1
        %s173 = smul.addr %s172, 65
        %s174 = smul.addr %s173, 8
        %s175 = scalar_lea.vmem %s1, %s174
      $region24: #{tpu_custom_call.1} parent=19 // pred_fallthru
        _
      // Predicated region
      $region25: #{tpu_custom_call.1} parent=19 // pred_check
        %p176 = pneg %p83
      $region26: #{tpu_custom_call.1} parent=19 // pred_check_branch
        %178 = sbr.rel (%p176) target = $region28
      $region27: #{tpu_custom_call.1} parent=19 // pred_region
        %p179 = scmp.lt.s32.totalorder %s25, 48
        %s180 = scalar_select %p179, %s25, 48
        %p181 = scmp.lt.s32.totalorder %s24, 0
        %s182 = scalar_select %p181, %s24, 0
        %s183 = sadd.s32 %s182, %s180
        %s184 = smul.addr %s183, 2
        %s185 = scalar_lea.vmem %s2, %s184
      $region28: #{tpu_custom_call.1} parent=19 // pred_fallthru
        _
    $region20: #{tpu_custom_call.1} parent=5 // pred_fallthru
      _
    %p186 = scmp.le.s32.totalorder 1, %s16
    %p187 = scmp.lt.s32.totalorder %s16, 99
    %p188 = pnand %p186, %p187
    %p189 = pneg %p188
    // Predicated region
    $region29: #{tpu_custom_call.1} parent=5 // pred_check
      _
    $region30: #{tpu_custom_call.1} parent=5 // pred_check_branch
      %191 = sbr.rel (%p188) target = $region32
    $region31: #{tpu_custom_call.1} parent=5 // pred_region
      %s192 = ssub.s32 %s16, 1
      %p193 = scmp.lt.s32.totalorder %s26, 1
      %s194 = scalar_select %p193, %s26, 1
      %s195 = smul.addr %s194, 65
      %s196 = smul.addr %s195, 8
      %s197 = scalar_lea.vmem %s1, %s196
      %p198 = pneg %p61
      %p199 = pneg %p58
      %p200 = scmp.lt.s32.totalorder %s28, 48
      %s201 = scalar_select %p200, %s28, 48
      %p202 = scmp.lt.s32.totalorder %s27, 0
      %s203 = scalar_select %p202, %s27, 0
      %s204 = sadd.s32 %s203, %s201
      %s205 = smul.addr %s204, 2
      %s206 = scalar_lea.vmem %s2, %s205
      %p207 = pneg %p89
      %p208 = pneg %p86
      %p209 = scmp.lt.s32.totalorder %s27, 0
      %s210 = scalar_select %p209, %s27, 0
      %s211 = scalar_lea.vmem %s3, %s210
      %p212 = pneg %p115
      %p213 = pneg %p112
      %p214 = pneg %p143
      %p215 = pneg %p140
      %p216 = scmp.lt.s32.totalorder %s26, 1
      %s217 = scalar_select %p216, %s26, 1
      %p218 = scmp.lt.s32.totalorder %s27, 0
      %s219 = scalar_select %p218, %s27, 0
      %s220 = smul.addr %s217, 16
      %s221 = sadd.s32 %s219, %s220
      %s222 = smul.addr %s221, 8
      %s223 = scalar_lea.vmem %s4, %s222
      %p224 = scmp.lt.s32.totalorder %s26, 1
      %s225 = scalar_select %p224, %s26, 1
      %s226 = smul.addr %s225, 65
      %s227 = smul.addr %s226, 8
      %s228 = scalar_lea.vmem %s1, %s227
      %p229 = scmp.lt.s32.totalorder %s28, 48
      %s230 = scalar_select %p229, %s28, 48
      %p231 = scmp.lt.s32.totalorder %s27, 0
      %s232 = scalar_select %p231, %s27, 0
      %s233 = sadd.s32 %s232, %s230
      %s234 = smul.addr %s233, 2
      %s235 = scalar_lea.vmem %s2, %s234
      %p236 = scmp.lt.s32.totalorder %s27, 0
      %s237 = scalar_select %p236, %s27, 0
      %s238 = scalar_lea.vmem %s3, %s237
      %p239 = scmp.lt.s32.totalorder %s26, 1
      %s240 = scalar_select %p239, %s26, 1
      %p241 = scmp.lt.s32.totalorder %s27, 0
      %s242 = scalar_select %p241, %s27, 0
      %s243 = smul.addr %s240, 16
      %s244 = sadd.s32 %s242, %s243
      %s245 = smul.addr %s244, 8
      %s246 = scalar_lea.vmem %s4, %s245
      %p248 = scmp.eq.s32.totalorder %s28, 0
      // Predicated region
      $region33: #{tpu_custom_call.1} parent=31 // pred_check
        %p249 = pneg %p248
      $region34: #{tpu_custom_call.1} parent=31 // pred_check_branch
        %251 = sbr.rel (%p249) target = $region36
      $region35: #{tpu_custom_call.1} parent=31 // pred_region
        %vm252 = vcmask 523264
        %253 = vst.msk [vmem:[#allocation2] sm:$0xff] %vm252, 0.0
        %254 = vst.msk [vmem:[#allocation2 + $0x8] sm:$0xff] %vm252, 0.0
        %255 = vst.msk [vmem:[#allocation2 + $0x10] sm:$0xff] %vm252, 0.0
        %256 = vst.msk [vmem:[#allocation2 + $0x18] sm:$0xff] %vm252, 0.0
        %257 = vst.msk [vmem:[#allocation2 + $0x20] sm:$0xff] %vm252, 0.0
        %258 = vst.msk [vmem:[#allocation2 + $0x28] sm:$0xff] %vm252, 0.0
        %259 = vst.msk [vmem:[#allocation2 + $0x30] sm:$0xff] %vm252, 0.0
        %260 = vst.msk [vmem:[#allocation2 + $0x38] sm:$0xff] %vm252, 0.0
        %261 = vst.msk [vmem:[#allocation2 + $0x40] sm:$0xff] %vm252, 0.0
        %262 = vst.msk [vmem:[#allocation2 + $0x48] sm:$0xff] %vm252, 0.0
        %263 = vst.msk [vmem:[#allocation2 + $0x50] sm:$0xff] %vm252, 0.0
        %264 = vst.msk [vmem:[#allocation2 + $0x58] sm:$0xff] %vm252, 0.0
        %265 = vst.msk [vmem:[#allocation2 + $0x60] sm:$0xff] %vm252, 0.0
        %266 = vst.msk [vmem:[#allocation2 + $0x68] sm:$0xff] %vm252, 0.0
        %267 = vst.msk [vmem:[#allocation2 + $0x70] sm:$0xff] %vm252, 0.0
        %vm268 = vcmask 516096
        %269 = vst.msk [vmem:[#allocation2 + $0x78] sm:$0x1] %vm268, 0.0
      $region36: #{tpu_custom_call.1} parent=31 // pred_fallthru
        _
      %s270 = sld [smem:[#allocation4 + %s28]]
      %s271 = scalar_lea.vmem %s228, %s270
      %v272 = vld [vmem:[%s271] sm:$0xff]
      %v273 = vld [vmem:[%s271 + $0x8] sm:$0xff]
      %v274 = vld [vmem:[%s271 + $0x10] sm:$0xff]
      %v275 = vld [vmem:[%s271 + $0x18] sm:$0xff]
      %v276 = vld [vmem:[%s271 + $0x20] sm:$0xff]
      %v277 = vld [vmem:[%s271 + $0x28] sm:$0xff]
      %v278 = vld [vmem:[%s271 + $0x30] sm:$0xff]
      %v279 = vld [vmem:[%s271 + $0x38] sm:$0xff]
      %v280 = vld [vmem:[%s271 + $0x40] sm:$0xff]
      %v281 = vld [vmem:[%s271 + $0x48] sm:$0xff]
      %v282 = vld [vmem:[%s271 + $0x50] sm:$0xff]
      %v283 = vld [vmem:[%s271 + $0x58] sm:$0xff]
      %v284 = vld [vmem:[%s271 + $0x60] sm:$0xff]
      %v285 = vld [vmem:[%s271 + $0x68] sm:$0xff]
      %v286 = vld [vmem:[%s271 + $0x70] sm:$0xff]
      %v287 = vld [vmem:[%s271 + $0x78] sm:$0x1]
      %v288 = vpack.c.bf16 %v273, %v272
      %v289 = vpack.c.bf16 %v275, %v274
      %v290 = vpack.c.bf16 %v277, %v276
      %v291 = vpack.c.bf16 %v279, %v278
      %v292 = vpack.c.bf16 %v281, %v280
      %v293 = vpack.c.bf16 %v283, %v282
      %v294 = vpack.c.bf16 %v285, %v284
      %v295 = vpack.c.bf16 %v287, %v286
      %v296 = vld [vmem:[#allocation2] sm:$0xff]
      %v297 = vld [vmem:[#allocation2 + $0x8] sm:$0xff]
      %v298 = vld [vmem:[#allocation2 + $0x10] sm:$0xff]
      %v299 = vld [vmem:[#allocation2 + $0x18] sm:$0xff]
      %v300 = vld [vmem:[#allocation2 + $0x20] sm:$0xff]
      %v301 = vld [vmem:[#allocation2 + $0x28] sm:$0xff]
      %v302 = vld [vmem:[#allocation2 + $0x30] sm:$0xff]
      %v303 = vld [vmem:[#allocation2 + $0x38] sm:$0xff]
      %v304 = vld [vmem:[#allocation2 + $0x40] sm:$0xff]
      %v305 = vld [vmem:[#allocation2 + $0x48] sm:$0xff]
      %v306 = vld [vmem:[#allocation2 + $0x50] sm:$0xff]
      %v307 = vld [vmem:[#allocation2 + $0x58] sm:$0xff]
      %v308 = vld [vmem:[#allocation2 + $0x60] sm:$0xff]
      %v309 = vld [vmem:[#allocation2 + $0x68] sm:$0xff]
      %v310 = vld [vmem:[#allocation2 + $0x70] sm:$0xff]
      %v311 = vld [vmem:[#allocation2 + $0x78] sm:$0x1]
      %v312 = vld [vmem:[%s235] sm:$0x3]
      %vm313 = vcmask 23552
      %v315 = vsel %vm313, %v288, 0
      %v318 = vsel %vm313, %v289, 0
      %v321 = vsel %vm313, %v290, 0
      %v324 = vsel %vm313, %v291, 0
      %v327 = vsel %vm313, %v292, 0
      %v330 = vsel %vm313, %v293, 0
      %v333 = vsel %vm313, %v294, 0
      %v336 = vsel %vm313, %v295, 0
      %vm338 = vcmask 1040384
      %vm339 = vcmask 1041408
      %v340 = vsel %vm338, 4294967295, 65535
      %v341 = vsel %vm339, %v340, 0
      %v343 = vand.u32 %v312, %v341
      %345 = vmatprep.subr.bf16.mxu0 0
      %346 = vmatpush1.bf16.msra.mxu0 %v343
      %347 = vmatprep.subr.bf16.mxu0 0
      %348 = vmatpush1.bf16.msra.mxu0 0
      %349 = vmatprep.subr.bf16.mxu0 0
      %350 = vmatpush1.bf16.msra.mxu0 0
      %351 = vmatprep.subr.bf16.mxu0 0
      %352 = vmatpush1.bf16.msra.mxu0 0
      %353 = vmatprep.subr.bf16.mxu0 0
      %354 = vmatpush1.bf16.msra.mxu0 0
      %355 = vmatprep.subr.bf16.mxu0 0
      %356 = vmatpush1.bf16.msra.mxu0 0
      %357 = vmatprep.subr.bf16.mxu0 0
      %358 = vmatpush1.bf16.msra.mxu0 0
      %359 = vmatprep.subr.bf16.mxu0 0
      %360 = vmatpush1.bf16.msra.mxu0 0
      %361 = vmatprep.subr.bf16.mxu0 0
      %362 = vmatpush1.bf16.msra.mxu0 0
      %363 = vmatprep.subr.bf16.mxu0 0
      %364 = vmatpush1.bf16.msra.mxu0 0
      %365 = vmatprep.subr.bf16.mxu0 0
      %366 = vmatpush1.bf16.msra.mxu0 0
      %367 = vmatprep.subr.bf16.mxu0 0
      %368 = vmatpush1.bf16.msra.mxu0 0
      %369 = vmatprep.subr.bf16.mxu0 0
      %370 = vmatpush1.bf16.msra.mxu0 0
      %371 = vmatprep.subr.bf16.mxu0 0
      %372 = vmatpush1.bf16.msra.mxu0 0
      %373 = vmatprep.subr.bf16.mxu0 0
      %374 = vmatpush1.bf16.msra.mxu0 0
      %375 = vmatprep.subr.bf16.mxu0 0
      %376 = vmatpush1.bf16.msra.mxu0 0
      %377 = vmatprep.mubr.bf16.mxu0 0
      %378 = vmatmul.mubr.bf16.gmra.mrb[0].mxu0 %v315
      %v379 = vpop.f32.mrb[0].mxu0
      %v380 = vadd.f32 0.0, %v379
      %v381 = vpop.f32.mrb[0].mxu0
      %v382 = vpop.f32.mrb[0].mxu0
      %v383 = vadd.f32 0.0, %v382
      %v384 = vpop.f32.mrb[0].mxu0
      %385 = vmatprep.mubr.bf16.mxu0 0
      %386 = vmatmul.mubr.bf16.gmra.mrb[0].mxu0 %v318
      %v387 = vpop.f32.mrb[0].mxu0
      %v388 = vadd.f32 0.0, %v387
      %v389 = vpop.f32.mrb[0].mxu0
      %v390 = vpop.f32.mrb[0].mxu0
      %v391 = vadd.f32 0.0, %v390
      %v392 = vpop.f32.mrb[0].mxu0
      %393 = vmatprep.mubr.bf16.mxu0 0
      %394 = vmatmul.mubr.bf16.gmra.mrb[0].mxu0 %v321
      %v395 = vpop.f32.mrb[0].mxu0
      %v396 = vadd.f32 0.0, %v395
      %v397 = vpop.f32.mrb[0].mxu0
      %v398 = vpop.f32.mrb[0].mxu0
      %v399 = vadd.f32 0.0, %v398
      %v400 = vpop.f32.mrb[0].mxu0
      %401 = vmatprep.mubr.bf16.mxu0 0
      %402 = vmatmul.mubr.bf16.gmra.mrb[0].mxu0 %v324
      %v403 = vpop.f32.mrb[0].mxu0
      %v404 = vadd.f32 0.0, %v403
      %v405 = vpop.f32.mrb[0].mxu0
      %v406 = vpop.f32.mrb[0].mxu0
      %v407 = vadd.f32 0.0, %v406
      %v408 = vpop.f32.mrb[0].mxu0
      %409 = vmatprep.mubr.bf16.mxu0 0
      %410 = vmatmul.mubr.bf16.gmra.mrb[0].mxu0 %v327
      %v411 = vpop.f32.mrb[0].mxu0
      %v412 = vadd.f32 0.0, %v411
      %v413 = vpop.f32.mrb[0].mxu0
      %v414 = vpop.f32.mrb[0].mxu0
      %v415 = vadd.f32 0.0, %v414
      %v416 = vpop.f32.mrb[0].mxu0
      %417 = vmatprep.mubr.bf16.mxu0 0
      %418 = vmatmul.mubr.bf16.gmra.mrb[0].mxu0 %v330
      %v419 = vpop.f32.mrb[0].mxu0
      %v420 = vadd.f32 0.0, %v419
      %v421 = vpop.f32.mrb[0].mxu0
      %v422 = vpop.f32.mrb[0].mxu0
      %v423 = vadd.f32 0.0, %v422
      %v424 = vpop.f32.mrb[0].mxu0
      %425 = vmatprep.mubr.bf16.mxu0 0
      %426 = vmatmul.mubr.bf16.gmra.mrb[0].mxu0 %v333
      %v427 = vpop.f32.mrb[0].mxu0
      %v428 = vadd.f32 0.0, %v427
      %v429 = vpop.f32.mrb[0].mxu0
      %v430 = vpop.f32.mrb[0].mxu0
      %v431 = vadd.f32 0.0, %v430
      %v432 = vpop.f32.mrb[0].mxu0
      %433 = vmatprep.mubr.bf16.mxu0 0
      %434 = vmatmul.mubr.bf16.gmra.mrb[0].mxu0 %v336
      %v435 = vpop.f32.mrb[0].mxu0
      %v436 = vadd.f32 0.0, %v435
      %v437 = vpop.f32.mrb[0].mxu0
      %v438 = vpop.f32.mrb[0].mxu0
      %v439 = vadd.f32 0.0, %v438
      %v440 = vpop.f32.mrb[0].mxu0
      %441 = vdwg.mxu0
      %v442 = vadd.f32 %v296, %v380
      %v443 = vadd.f32 %v297, %v383
      %v444 = vadd.f32 %v298, %v388
      %v445 = vadd.f32 %v299, %v391
      %v446 = vadd.f32 %v300, %v396
      %v447 = vadd.f32 %v301, %v399
      %v448 = vadd.f32 %v302, %v404
      %v449 = vadd.f32 %v303, %v407
      %v450 = vadd.f32 %v304, %v412
      %v451 = vadd.f32 %v305, %v415
      %v452 = vadd.f32 %v306, %v420
      %v453 = vadd.f32 %v307, %v423
      %v454 = vadd.f32 %v308, %v428
      %v455 = vadd.f32 %v309, %v431
      %v456 = vadd.f32 %v310, %v436
      %v457 = vadd.f32 %v311, %v439
      %vm458 = vcmask 523264
      %459 = vst.msk [vmem:[#allocation2] sm:$0xff] %vm458, %v442
      %460 = vst.msk [vmem:[#allocation2 + $0x8] sm:$0xff] %vm458, %v443
      %461 = vst.msk [vmem:[#allocation2 + $0x10] sm:$0xff] %vm458, %v444
      %462 = vst.msk [vmem:[#allocation2 + $0x18] sm:$0xff] %vm458, %v445
      %463 = vst.msk [vmem:[#allocation2 + $0x20] sm:$0xff] %vm458, %v446
      %464 = vst.msk [vmem:[#allocation2 + $0x28] sm:$0xff] %vm458, %v447
      %465 = vst.msk [vmem:[#allocation2 + $0x30] sm:$0xff] %vm458, %v448
      %466 = vst.msk [vmem:[#allocation2 + $0x38] sm:$0xff] %vm458, %v449
      %467 = vst.msk [vmem:[#allocation2 + $0x40] sm:$0xff] %vm458, %v450
      %468 = vst.msk [vmem:[#allocation2 + $0x48] sm:$0xff] %vm458, %v451
      %469 = vst.msk [vmem:[#allocation2 + $0x50] sm:$0xff] %vm458, %v452
      %470 = vst.msk [vmem:[#allocation2 + $0x58] sm:$0xff] %vm458, %v453
      %471 = vst.msk [vmem:[#allocation2 + $0x60] sm:$0xff] %vm458, %v454
      %472 = vst.msk [vmem:[#allocation2 + $0x68] sm:$0xff] %vm458, %v455
      %473 = vst.msk [vmem:[#allocation2 + $0x70] sm:$0xff] %vm458, %v456
      %vm474 = vcmask 516096
      %475 = vst.msk [vmem:[#allocation2 + $0x78] sm:$0x1] %vm474, %v457
      %p476 = scmp.eq.s32.totalorder %s28, 48
      // Predicated region
      $region37: #{tpu_custom_call.1} parent=31 // pred_check
        %p477 = pneg %p476
      $region38: #{tpu_custom_call.1} parent=31 // pred_check_branch
        %479 = sbr.rel (%p477) target = $region40
      $region39: #{tpu_custom_call.1} parent=31 // pred_region
        %v480 = vld [vmem:[#allocation2] sm:$0xff]
        %v481 = vld [vmem:[#allocation2 + $0x8] sm:$0xff]
        %v482 = vld [vmem:[#allocation2 + $0x10] sm:$0xff]
        %v483 = vld [vmem:[#allocation2 + $0x18] sm:$0xff]
        %v484 = vld [vmem:[#allocation2 + $0x20] sm:$0xff]
        %v485 = vld [vmem:[#allocation2 + $0x28] sm:$0xff]
        %v486 = vld [vmem:[#allocation2 + $0x30] sm:$0xff]
        %v487 = vld [vmem:[#allocation2 + $0x38] sm:$0xff]
        %v488 = vld [vmem:[#allocation2 + $0x40] sm:$0xff]
        %v489 = vld [vmem:[#allocation2 + $0x48] sm:$0xff]
        %v490 = vld [vmem:[#allocation2 + $0x50] sm:$0xff]
        %v491 = vld [vmem:[#allocation2 + $0x58] sm:$0xff]
        %v492 = vld [vmem:[#allocation2 + $0x60] sm:$0xff]
        %v493 = vld [vmem:[#allocation2 + $0x68] sm:$0xff]
        %v494 = vld [vmem:[#allocation2 + $0x70] sm:$0xff]
        %v495 = vld [vmem:[#allocation2 + $0x78] sm:$0x1]
        %v496 = vld [vmem:[%s238] sm:$0x1]
        %v498 = vlaneseq
        %v499 = vshrl.u32 %v498, 7
        %v500 = vsub.s32 0, %v499
        %v501 = vrot.slane %v496, %v500
        %v503 = vadd.f32 %v480, %v501
        %v504 = vadd.f32 %v481, %v501
        %v505 = vadd.f32 %v482, %v501
        %v506 = vadd.f32 %v483, %v501
        %v507 = vadd.f32 %v484, %v501
        %v508 = vadd.f32 %v485, %v501
        %v509 = vadd.f32 %v486, %v501
        %v510 = vadd.f32 %v487, %v501
        %v511 = vadd.f32 %v488, %v501
        %v512 = vadd.f32 %v489, %v501
        %v513 = vadd.f32 %v490, %v501
        %v514 = vadd.f32 %v491, %v501
        %v515 = vadd.f32 %v492, %v501
        %v516 = vadd.f32 %v493, %v501
        %v517 = vadd.f32 %v494, %v501
        %v518 = vadd.f32 %v495, %v501
        %519 = vst.msk [vmem:[%s246] sm:$0xff] %vm458, %v503
        %520 = vst.msk [vmem:[%s246 + $0x8] sm:$0xff] %vm458, %v504
        %521 = vst.msk [vmem:[%s246 + $0x10] sm:$0xff] %vm458, %v505
        %522 = vst.msk [vmem:[%s246 + $0x18] sm:$0xff] %vm458, %v506
        %523 = vst.msk [vmem:[%s246 + $0x20] sm:$0xff] %vm458, %v507
        %524 = vst.msk [vmem:[%s246 + $0x28] sm:$0xff] %vm458, %v508
        %525 = vst.msk [vmem:[%s246 + $0x30] sm:$0xff] %vm458, %v509
        %526 = vst.msk [vmem:[%s246 + $0x38] sm:$0xff] %vm458, %v510
        %527 = vst.msk [vmem:[%s246 + $0x40] sm:$0xff] %vm458, %v511
        %528 = vst.msk [vmem:[%s246 + $0x48] sm:$0xff] %vm458, %v512
        %529 = vst.msk [vmem:[%s246 + $0x50] sm:$0xff] %vm458, %v513
        %530 = vst.msk [vmem:[%s246 + $0x58] sm:$0xff] %vm458, %v514
        %531 = vst.msk [vmem:[%s246 + $0x60] sm:$0xff] %vm458, %v515
        %532 = vst.msk [vmem:[%s246 + $0x68] sm:$0xff] %vm458, %v516
        %533 = vst.msk [vmem:[%s246 + $0x70] sm:$0xff] %vm458, %v517
        %534 = vst.msk [vmem:[%s246 + $0x78] sm:$0x1] %vm474, %v518
      $region40: #{tpu_custom_call.1} parent=31 // pred_fallthru
        _
      %p535 = scmp.lt.s32.totalorder %s26, 1
      %s536 = scalar_select %p535, %s26, 1
      %p537 = scmp.lt.s32.totalorder %s27, 0
      %s538 = scalar_select %p537, %s27, 0
      %s539 = smul.addr %s536, 16
      %s540 = sadd.s32 %s538, %s539
      %s541 = smul.addr %s540, 8
      %s542 = scalar_lea.vmem %s4, %s541
      // Predicated region
      $region41: #{tpu_custom_call.1} parent=31 // pred_check
        %p543 = pneg %p140
      $region42: #{tpu_custom_call.1} parent=31 // pred_check_branch
        %545 = sbr.rel (%p543) target = $region44
      $region43: #{tpu_custom_call.1} parent=31 // pred_region
        _
      $region44: #{tpu_custom_call.1} parent=31 // pred_fallthru
        _
    $region32: #{tpu_custom_call.1} parent=5 // pred_fallthru
      _
    %p546 = scmp.le.s32.totalorder 2, %s16
    // Predicated region
    $region45: #{tpu_custom_call.1} parent=5 // pred_check
      %p547 = pneg %p546
    $region46: #{tpu_custom_call.1} parent=5 // pred_check_branch
      %549 = sbr.rel (%p547) target = $region48
    $region47: #{tpu_custom_call.1} parent=5 // pred_region
      %s550 = ssub.s32 %s16, 2
      // Predicated region
      $region49: #{tpu_custom_call.1} parent=47 // pred_check
        %p551 = pneg %p146
      $region50: #{tpu_custom_call.1} parent=47 // pred_check_branch
        %553 = sbr.rel (%p551) target = $region52
      $region51: #{tpu_custom_call.1} parent=47 // pred_region
        %p554 = scmp.lt.s32.totalorder %s29, 1
        %s555 = scalar_select %p554, %s29, 1
        %p556 = scmp.lt.s32.totalorder %s30, 0
        %s557 = scalar_select %p556, %s30, 0
        %s558 = smul.addr %s555, 16
        %s559 = sadd.s32 %s557, %s558
        %s560 = smul.addr %s559, 8
        %s561 = scalar_lea.vmem %s4, %s560
      $region52: #{tpu_custom_call.1} parent=47 // pred_fallthru
        _
    $region48: #{tpu_custom_call.1} parent=5 // pred_fallthru
      _
  $region6: #{tpu_custom_call.1} parent=0 // loop_footer
    %s20 = sadd.s32 1, %s16
  $region7: #{tpu_custom_call.1} parent=0 // loop_footer_branch
    %15 = sbr.rel target = $region3
  $region8: #{tpu_custom_call.1} parent=0 // loop_exit
    _

</llo_original>
